<compile_context>
chip_gen: v5e
topology: v5e:2x2
jax: 0.10.0
libtpu: 0.0.40
codegen_flags: <defaults>
</compile_context>

<pallas_src>
import math

import jax
import jax.numpy as jnp
from jax import lax
from jax.experimental import pallas as pl
from jax.experimental.pallas import tpu as pltpu


def _fixed_embedding_kernel(idx_ref, tbl_ref, o_ref):
    # idx_ref: [TILE_R, g] int32 -- g token ids per packed output row, already
    #          offset into slot j's one-hot lane range (id + j * c_in).
    # tbl_ref: [g*c_in, g*d_model] block-diagonal replicated table (VMEM resident).
    # o_ref:   [TILE_R, g*d_model] lane-dense packed output tile.
    tile_r, g = idx_ref.shape
    k = tbl_ref.shape[0]

    ids = idx_ref[...]                                           # [TILE_R, g]
    lane = lax.broadcasted_iota(jnp.int32, (tile_r, k), 1)       # [TILE_R, g*c_in]
    onehot = lane == ids[:, 0:1]
    for j in range(1, g):                                        # g: small trace-time constant
        onehot = onehot | (lane == ids[:, j:j + 1])

    # Exactly one nonzero per (row, slot) -> accumulation dtype is irrelevant;
    # keep the table dtype end-to-end (no f32 accumulate + cast pass).
    o_ref[...] = jnp.dot(
        onehot.astype(tbl_ref.dtype),
        tbl_ref[...],
        preferred_element_type=o_ref.dtype,
    )


def make_fixed_table(c_in, d_model, dtype=jnp.float32):
    """Sinusoidal table identical to the PyTorch FixedEmbedding constructor."""
    position = jnp.arange(c_in, dtype=jnp.float32)[:, None]                 # [c_in, 1]
    div_term = jnp.exp(
        jnp.arange(0, d_model, 2, dtype=jnp.float32) * -(math.log(10000.0) / d_model)
    )
    w = jnp.zeros((c_in, d_model), dtype=jnp.float32)
    w = w.at[:, 0::2].set(jnp.sin(position * div_term))
    w = w.at[:, 1::2].set(jnp.cos(position * div_term))
    return w.astype(dtype)


def fixed_embedding(x_idx, table, *, tile_m=None):
    """x_idx: int [B, L] indices in [0, c_in); table: [c_in, d_model] -> [B, L, d_model]."""
    B, L = x_idx.shape
    c_in, d_model = table.shape
    itemsize = jnp.dtype(table.dtype).itemsize
    M = B * L

    # Lane-packing factor: g tokens per packed output row so the output last dim
    # is a multiple of 128 lanes (unmasked stores).
    g = 128 // d_model if (d_model < 128 and 128 % d_model == 0) else 1
    # TODO(synk): for d_model < 128 that does not divide 128, use
    #             g = 128 // gcd(d_model, 128) instead of falling back to g=1.

    # Tile size: target ~512 KiB output tiles (measured >=85% of HBM roofline),
    # scaled with d_model, aligned so TILE_R = TILE_M // g is a sublane multiple.
    if tile_m is None:
        tile_m = int(min(4096, max(256, (512 * 1024) // (d_model * itemsize))))
    align = 8 * g
    tile_m = max(align, (tile_m // align) * align)
    TILE_M = tile_m if M >= tile_m else max(align, ((M + align - 1) // align) * align)
    TILE_R = TILE_M // g
    n_tiles = pl.cdiv(M, TILE_M)
    M_pad = n_tiles * TILE_M

    # Indices: clamp (nn.Embedding would error on OOB; clamping avoids silent
    # zero rows), pad (padded rows read row 0 and are sliced off), and pre-offset
    # each packed slot j into its own one-hot lane range [j*c_in, (j+1)*c_in).
    idx = jnp.clip(x_idx.reshape(M).astype(jnp.int32), 0, c_in - 1)
    if M_pad != M:
        idx = jnp.pad(idx, (0, M_pad - M))
    idx2d = idx.reshape(M_pad // g, g) + (jnp.arange(g, dtype=jnp.int32) * c_in)[None, :]

    # Block-diagonal replicated table so one matmul emits g packed embeddings/row.
    tbl = table if g == 1 else jnp.kron(jnp.eye(g, dtype=table.dtype), table)
    K, N = g * c_in, g * d_model

    # Explicit VMEM budget from the real footprint (kept under v7x's 64 MiB).
    tile_bytes = (
        2 * TILE_R * g * 4            # index tiles (double-buffered)
        + 2 * K * N * itemsize        # table (budget 2x in case single-buffer hint is ignored)
        + 2 * TILE_R * N * itemsize   # output tiles (double-buffered)
        + 4 * TILE_R * K * 4          # one-hot + compare intermediates
    )
    vmem_limit = max(32 << 20, min(60 << 20, int(tile_bytes) + (16 << 20)))

    # Gather-like scheduling hint: the op is HBM/store bound, not MXU bound.
    cost = pl.CostEstimate(
        flops=0,
        transcendentals=0,
        bytes_accessed=int(M_pad * 4 + K * N * itemsize + M_pad * d_model * itemsize),
    )

    out = pl.pallas_call(
        _fixed_embedding_kernel,
        out_shape=jax.ShapeDtypeStruct((M_pad // g, N), table.dtype),
        grid_spec=pltpu.PrefetchScalarGridSpec(
            num_scalar_prefetch=0,
            grid=(n_tiles,),
            in_specs=[
                # Index tile, pipelined along the row-tile axis.
                pl.BlockSpec((TILE_R, g), lambda i: (i, 0)),
                # Constant table: resident across all tiles, single-buffered.
                pl.BlockSpec((K, N), lambda i: (0, 0), pipeline_mode=pl.Buffered(1)),
            ],
            out_specs=pl.BlockSpec((TILE_R, N), lambda i: (i, 0)),
        ),
        compiler_params=pltpu.CompilerParams(
            dimension_semantics=("parallel",),
            vmem_limit_bytes=int(vmem_limit),
        ),
        cost_estimate=cost,
    )(idx2d, tbl)

    # Packed [M_pad//g, g*d_model] -> [M, d_model] is a free row-major reshape.
    return out.reshape(M_pad, d_model)[:M].reshape(B, L, d_model)


if __name__ == "__main__":
    key = jax.random.PRNGKey(0)

    # Small shapes consistent with FixedEmbedding usage (e.g. hour-of-day vocab):
    B, L, c_in, d_model = 2, 8, 24, 32
    x = jax.random.randint(key, (B, L), 0, c_in, dtype=jnp.int32)
    table = make_fixed_table(c_in, d_model)   # f32; use dtype=jnp.bfloat16 to trade precision for BW

    y = jax.block_until_ready(fixed_embedding(x, table))

    # Reference: plain JAX embedding lookup of the fixed table.
    y_ref = jnp.take(table, x.reshape(-1), axis=0).reshape(B, L, d_model)
    assert y.shape == (B, L, d_model)
    assert jnp.allclose(y, y_ref, atol=1e-6, rtol=1e-6)

    print("KERNEL_OK")
</pallas_src>

<mosaic_0001>
module attributes {stable_mosaic.version = 11 : i64} {
  func.func @_fixed_embedding_kernel(%arg0: i32, %arg1: memref<8x4xi32, #tpu.memory_space<vmem>>, %arg2: memref<96x128xf32, #tpu.memory_space<vmem>>, %arg3: memref<8x128xf32, #tpu.memory_space<vmem>>) attributes {dimension_semantics = [#tpu.dimension_semantics<parallel>], iteration_bounds = array<i64: 1>, scalar_prefetch = 0 : i64, scratch_operands = 0 : i64, tpu.core_type = #tpu.core_type<tc>, window_params = [{transform_indices = @transform_0, window_bounds = array<i64: 8, 4>}, {pipeline_mode = #tpu.pipeline_mode<synchronous>, transform_indices = @transform_1, window_bounds = array<i64: 96, 128>}, {transform_indices = @transform_2, window_bounds = array<i64: 8, 128>}]} {
    %c0 = arith.constant 0 : index
    %c0_0 = arith.constant 0 : index
    %0 = vector.load %arg1[%c0, %c0_0] : memref<8x4xi32, #tpu.memory_space<vmem>>, vector<8x4xi32>
    %1 = tpu.iota {dimensions = array<i32: 1>} : vector<8x96xi32>
    %2 = vector.extract_strided_slice %0 {offsets = [0, 0], sizes = [8, 1], strides = [1, 1]} : vector<8x4xi32> to vector<8x1xi32>
    %3 = vector.broadcast %2 : vector<8x1xi32> to vector<8x96xi32>
    %4 = arith.cmpi eq, %1, %3 : vector<8x96xi32>
    %5 = vector.extract_strided_slice %0 {offsets = [0, 1], sizes = [8, 1], strides = [1, 1]} : vector<8x4xi32> to vector<8x1xi32>
    %6 = vector.broadcast %5 : vector<8x1xi32> to vector<8x96xi32>
    %7 = arith.cmpi eq, %1, %6 : vector<8x96xi32>
    %8 = arith.ori %4, %7 : vector<8x96xi1>
    %9 = vector.extract_strided_slice %0 {offsets = [0, 2], sizes = [8, 1], strides = [1, 1]} : vector<8x4xi32> to vector<8x1xi32>
    %10 = vector.broadcast %9 : vector<8x1xi32> to vector<8x96xi32>
    %11 = arith.cmpi eq, %1, %10 : vector<8x96xi32>
    %12 = arith.ori %8, %11 : vector<8x96xi1>
    %13 = vector.extract_strided_slice %0 {offsets = [0, 3], sizes = [8, 1], strides = [1, 1]} : vector<8x4xi32> to vector<8x1xi32>
    %14 = vector.broadcast %13 : vector<8x1xi32> to vector<8x96xi32>
    %15 = arith.cmpi eq, %1, %14 : vector<8x96xi32>
    %16 = arith.ori %12, %15 : vector<8x96xi1>
    %17 = arith.extui %16 : vector<8x96xi1> to vector<8x96xi32>
    %18 = arith.sitofp %17 : vector<8x96xi32> to vector<8x96xf32>
    %c0_1 = arith.constant 0 : index
    %c0_2 = arith.constant 0 : index
    %19 = vector.load %arg2[%c0_1, %c0_2] : memref<96x128xf32, #tpu.memory_space<vmem>>, vector<96x128xf32>
    %cst = arith.constant dense<0.000000e+00> : vector<8x128xf32>
    %20 = tpu.matmul %18, %19, %cst {dimension_numbers = #tpu.dot_dimension_numbers<[1], [0], [0], [1], [0, 0, 1, 1], [], []>} : vector<8x96xf32>, vector<96x128xf32>, vector<8x128xf32> -> vector<8x128xf32>
    %c0_3 = arith.constant 0 : index
    %c0_4 = arith.constant 0 : index
    %21 = vector.load %arg3[%c0_3, %c0_4] : memref<8x128xf32, #tpu.memory_space<vmem>>, vector<8x128xf32>
    tpu.vector_store %arg3[%c0_3, %c0_4], %20 {strides = array<i32>} : memref<8x128xf32, #tpu.memory_space<vmem>>, vector<8x128xf32>,
    return
  }
  func.func @transform_0(%arg0: i32) -> (i32, i32) {
    %c0_i32 = arith.constant 0 : i32
    %c0_i32_0 = arith.constant 0 : i32
    return %arg0, %c0_i32 : i32, i32
  }
  func.func @transform_1(%arg0: i32) -> (i32, i32) {
    %c0_i32 = arith.constant 0 : i32
    %c0_i32_0 = arith.constant 0 : i32
    %c0_i32_1 = arith.constant 0 : i32
    return %c0_i32, %c0_i32_0 : i32, i32
  }
  func.func @transform_2(%arg0: i32) -> (i32, i32) {
    %c0_i32 = arith.constant 0 : i32
    %c0_i32_0 = arith.constant 0 : i32
    return %arg0, %c0_i32 : i32, i32
  }
}

</mosaic_0001>

<llo_original>
// kernel: tpu_custom_call.1
$region0: #{tpu_custom_call.1}
  #allocation0 [shape = 'u32[]', space=smem, size = 0x4, offset = 0x4, fixed_abs, tag = 'smem constant byte address 0x4 - core index']
  #allocation1 [shape = 'u32[72,128]{1,0:T(1,128)}', space=vmem, size = 0x9000, scoped, tag = 'internal scratch']
  %s0 = inlined_call_operand.vmem [shape: s32[8,4], index: 0, kind: input, shape index: {}]
  %s1 = inlined_call_operand.hbm [shape: f32[96,128], index: 1, kind: input, shape index: {}]
  %s2 = inlined_call_operand.hbm [shape: f32[8,128], index: 2, kind: output, shape index: {}]
  %s3 = sld [smem:[#allocation0]]
  $region22: #{tpu_custom_call.1} parent=0
    _
  %s5 = ssub.s32 1, %s3
  %s6 = scalar_select 0, %s5, %s3
  $region1: #{tpu_custom_call.1} parent=0
    #allocation2 [shape = 'u8[49152]{0}', space=vmem, size = 0xc000, scoped, tag = 'input window, operand 1, single buffered']
    #allocation3 [shape = 's32[1]{0}', space=sflag, size = 0x4, scoped, tag = 'scoped memory for tpu_custom_call.1']
    #allocation4 [shape = 's32[1]{0}', space=sflag, size = 0x4, scoped, tag = 'scoped memory for tpu_custom_call.1']
    #allocation5 [shape = 'u8[4096]{0}', space=vmem, size = 0x1000, scoped, tag = 'output window, operand 0, single buffered']
    %7 = vsyncpa [#allocation3], 0
    %8 = vsyncpa [#allocation4], 0
    // Predicated region
    $region2: #{tpu_custom_call.1} parent=1 // pred_check
      _
    $region3: #{tpu_custom_call.1} parent=1 // pred_check_branch
      %10 = sbr.rel (0) target = $region5
    $region4: #{tpu_custom_call.1} parent=1 // pred_region
      _
    $region5: #{tpu_custom_call.1} parent=1 // pred_fallthru
      _
    // Predicated region
    $region6: #{tpu_custom_call.1} parent=1 // pred_check
      _
    $region7: #{tpu_custom_call.1} parent=1 // pred_check_branch
      %12 = sbr.rel (0) target = $region9
    $region8: #{tpu_custom_call.1} parent=1 // pred_region
      %14 = vsyncadd [#allocation3], 0
      %s15 = sshll.u32 %s1, 4
      %s16 = int_to_ptr.hbm [resolvable:$true] %s15
      %s17 = sshll.u32 [#allocation2], 4
      %s18 = int_to_ptr.vmem [resolvable:$true] %s17
      %23 = dma.hbm_to_vmem [thread:$0]  %s16, 1536, %s18, [#allocation3], 128, 128, 8
    $region9: #{tpu_custom_call.1} parent=1 // pred_fallthru
      _
    // Predicated region
    $region10: #{tpu_custom_call.1} parent=1 // pred_check
      _
    $region11: #{tpu_custom_call.1} parent=1 // pred_check_branch
      %25 = sbr.rel (0) target = $region13
    $region12: #{tpu_custom_call.1} parent=1 // pred_region
      %27 = dma.done [#allocation3], 1536
    $region13: #{tpu_custom_call.1} parent=1 // pred_fallthru
      _
    %v28 = vld [vmem:[%s0] sm:$0xff]
    %v29 = vlaneseq
    %v30 = vand.u32 %v29, 127
    %31 = vset.pattern.permute.xlu0 0
    %32 = vperm.xlu0 %31, %v28
    %v33 = vpop.permute.xlu0 %32
    %vm34 = vcmp.eq.s32.totalorder %v30, %v33
    %35 = vset.pattern.permute.xlu0 1
    %36 = vperm.xlu0 %35, %v28
    %v37 = vpop.permute.xlu0 %36
    %vm38 = vcmp.eq.s32.totalorder %v30, %v37
    %vm39 = vmor %vm34, %vm38
    %40 = vset.pattern.permute.xlu0 2
    %41 = vperm.xlu0 %40, %v28
    %v42 = vpop.permute.xlu0 %41
    %vm43 = vcmp.eq.s32.totalorder %v30, %v42
    %vm44 = vmor %vm39, %vm43
    %45 = vset.pattern.permute.xlu0 3
    %46 = vperm.xlu0 %45, %v28
    %v47 = vpop.permute.xlu0 %46
    %vm48 = vcmp.eq.s32.totalorder %v30, %v47
    %vm49 = vmor %vm44, %vm48
    %v50 = vsel %vm49, 1, 0
    %v51 = vcvt.s32.f32 %v50
    %v52 = vld [vmem:[#allocation2] sm:$0xff]
    %v53 = vld [vmem:[#allocation2 + $0x8] sm:$0xff]
    %v54 = vld [vmem:[#allocation2 + $0x10] sm:$0xff]
    %v55 = vld [vmem:[#allocation2 + $0x18] sm:$0xff]
    %v56 = vld [vmem:[#allocation2 + $0x20] sm:$0xff]
    %v57 = vld [vmem:[#allocation2 + $0x28] sm:$0xff]
    %v58 = vld [vmem:[#allocation2 + $0x30] sm:$0xff]
    %v59 = vld [vmem:[#allocation2 + $0x38] sm:$0xff]
    %v60 = vld [vmem:[#allocation2 + $0x40] sm:$0xff]
    %v61 = vld [vmem:[#allocation2 + $0x48] sm:$0xff]
    %v62 = vld [vmem:[#allocation2 + $0x50] sm:$0xff]
    %v63 = vld [vmem:[#allocation2 + $0x58] sm:$0xff]
    %vm64 = vcmask 785408
    %v66 = vsel %vm64, %v51, 0
    %68 = vmatpush.msra.mxu0 0.0
    %69 = vmatpush.msra.mxu0 0.0
    %70 = vmatpush.msra.mxu0 0.0
    %71 = vmatpush.msra.mxu0 0.0
    %72 = vmatpush.msra.mxu0 %v63
    %73 = vmatpush.msra.mxu0 %v62
    %74 = vmatpush.msra.mxu0 %v61
    %75 = vmatpush.msra.mxu0 %v60
    %76 = vmatpush.msra.mxu0 %v59
    %77 = vmatpush.msra.mxu0 %v58
    %78 = vmatpush.msra.mxu0 %v57
    %79 = vmatpush.msra.mxu0 %v56
    %80 = vmatpush.msra.mxu0 %v55
    %81 = vmatpush.msra.mxu0 %v54
    %82 = vmatpush.msra.mxu0 %v53
    %83 = vmatpush.msra.mxu0 %v52
    %84 = vmatmul.f32.gmra.mxu0 %v66
    %v85 = vpop.f32.mrf.mxu0
    %v86 = vadd.f32 0.0, %v85
    %87 = vdwg.mxu0
    %88 = vst [vmem:[#allocation5] sm:$0xff] %v86
    // Predicated region
    $region14: #{tpu_custom_call.1} parent=1 // pred_check
      _
    $region15: #{tpu_custom_call.1} parent=1 // pred_check_branch
      %90 = sbr.rel (0) target = $region17
    $region16: #{tpu_custom_call.1} parent=1 // pred_region
      %92 = vsyncadd [#allocation4], 0
      %s94 = sshll.u32 [#allocation5], 4
      %s95 = int_to_ptr.vmem [resolvable:$true] %s94
      %s96 = sshll.u32 %s2, 4
      %s97 = int_to_ptr.hbm [resolvable:$true] %s96
      %99 = dma.vmem_to_hbm [thread:$0]  %s95, 128, %s97, [#allocation4]
    $region17: #{tpu_custom_call.1} parent=1 // pred_fallthru
      _
    // Predicated region
    $region18: #{tpu_custom_call.1} parent=1 // pred_check
      _
    $region19: #{tpu_custom_call.1} parent=1 // pred_check_branch
      %101 = sbr.rel (0) target = $region21
    $region20: #{tpu_custom_call.1} parent=1 // pred_region
      %103 = dma.done [#allocation4], 128
    $region21: #{tpu_custom_call.1} parent=1 // pred_fallthru
      _
    %104 = vsyncpa [#allocation3], 1
    %105 = vsyncpa [#allocation4], 1

</llo_original>
